<compile_context>
chip_gen: v7x
topology: tpu7x:2x2x1
jax: 0.10.0
libtpu: 0.0.40
codegen_flags: <defaults>
</compile_context>

<pallas_src>
import jax
import jax.numpy as jnp
from jax.experimental import pallas as pl
from jax.experimental.pallas import tpu as pltpu

# mmaction-style per-channel normalization constants (0..255 pixel range)
MEAN = jnp.array([123.675, 116.28, 103.53], jnp.float32)
STD = jnp.array([58.395, 57.12, 57.375], jnp.float32)


# ----------------------------- helpers --------------------------------------

def _round_up(x, m):
    return (x + m - 1) // m * m


def fold_preprocess_into_conv(w, b, mean, std):
    """conv(w, (x-mean)/std) + b == conv(w/std, x) + (b - sum(w/std * mean))."""
    inv_std = (1.0 / std).astype(jnp.float32)
    w_f = w * inv_std[None, :, None, None, None]
    b_f = b - jnp.sum(w_f * mean[None, :, None, None, None], axis=(1, 2, 3, 4))
    return w_f, b_f


def pad_with_channel_mean(x, mean, padding):
    """Pad [N,C,T,H,W] with the per-channel mean so the folded conv reproduces
    zero-padding of the *normalized* input exactly."""
    N, C, T, H, W = x.shape
    pT, pH, pW = padding
    full = (N, C, T + 2 * pT, H + 2 * pH, W + 2 * pW)
    xp = jnp.broadcast_to(mean.reshape(1, C, 1, 1, 1).astype(x.dtype), full)
    return jax.lax.dynamic_update_slice(xp, x, (0, 0, pT, pH, pW))


def im2col_3d(xp, ksize, strides):
    """xp: pre-padded [N, C, Tp, Hp, Wp] -> patches [N, To*Ho*Wo, C*kT*kH*kW]
    (column order matches PyTorch weight.reshape(Cout, -1))."""
    kT, kH, kW = ksize
    sT, sH, sW = strides
    N, C, Tp, Hp, Wp = xp.shape
    To = (Tp - kT) // sT + 1
    Ho = (Hp - kH) // sH + 1
    Wo = (Wp - kW) // sW + 1
    cols = []
    for dt in range(kT):
        for dh in range(kH):
            for dw in range(kW):
                sl = xp[:, :,
                        dt:dt + sT * To:sT,
                        dh:dh + sH * Ho:sH,
                        dw:dw + sW * Wo:sW]          # [N, C, To, Ho, Wo]
                cols.append(sl)
    patches = jnp.stack(cols, axis=2)                # [N, C, 27, To, Ho, Wo]
    patches = patches.transpose(0, 3, 4, 5, 1, 2)    # [N, To, Ho, Wo, C, 27]
    patches = patches.reshape(N, To * Ho * Wo, C * kT * kH * kW)
    return patches, (To, Ho, Wo)


# ----------------------------- Pallas kernel --------------------------------

def _make_conv_pool_kernel(tm, m_valid, inv_m, need_row_mask):
    """Fused (im2col-matmul + bias + ReLU + global mean-pool) per clip.

    grid = (N_clips, num_m_tiles); the M-tile axis is a reduction carried in a
    VMEM accumulator; output (1, 1, Np) written on the last M tile of each clip.
    """
    def kernel(p_ref, w_ref, b_ref, o_ref, acc_ref):
        m = pl.program_id(1)

        @pl.when(m == 0)
        def _init():
            acc_ref[...] = jnp.zeros_like(acc_ref)

        # (TM, Kp) bf16 @ (Kp, Np) bf16 -> f32 on the MXU
        y = jnp.dot(p_ref[...], w_ref[...], preferred_element_type=jnp.float32)
        y = jnp.maximum(y + b_ref[...], 0.0)

        if need_row_mask:
            # mask padded patch rows (they would otherwise contribute ReLU(bias))
            row = m * tm + jax.lax.broadcasted_iota(jnp.int32, y.shape, 0)
            y = jnp.where(row < m_valid, y, 0.0)

        acc_ref[...] += jnp.sum(y, axis=0, keepdims=True)

        @pl.when(m == pl.num_programs(1) - 1)
        def _finalize():
            o_ref[...] = (acc_ref[...] * inv_m).reshape(o_ref.shape)

    return kernel


def conv3d_relu_meanpool_pallas(x, w, b, strides=(1, 2, 2), padding=(1, 1, 1),
                                tm_max=512):
    """x: raw frames [N, C, T, H, W]; w/b: normalization-folded conv params.
    Returns [N, Cout] = mean over (To, Ho, Wo) of ReLU(conv3d(x_norm, w0) + b0)."""
    N, C = x.shape[0], x.shape[1]
    Cout = w.shape[0]

    xp = pad_with_channel_mean(x, MEAN, padding).astype(jnp.bfloat16)
    patches, _ = im2col_3d(xp, (3, 3, 3), strides)        # [N, M, K] bf16
    _, M, K = patches.shape

    Kp = _round_up(K, 128)                                # 81  -> 128 (lane-dense LHS)
    Np = _round_up(Cout, 128)                             # 32  -> 128 (lane-dense out)
    TM = min(tm_max, _round_up(M, 128))                   # M-tile (fits VMEM on v7x too)
    Mp = _round_up(M, TM)
    num_m = Mp // TM

    patches = jnp.pad(patches, ((0, 0), (0, Mp - M), (0, Kp - K)))
    patches = patches.reshape(N * Mp, Kp)                                   # bf16
    wm = jnp.pad(w.reshape(Cout, K).T, ((0, Kp - K), (0, Np - Cout)))
    wm = wm.astype(jnp.bfloat16)                                            # [Kp, Np]
    bm = jnp.pad(b.reshape(1, Cout), ((0, 0), (0, Np - Cout)))
    bm = bm.astype(jnp.float32)                                             # [1, Np]

    kernel = _make_conv_pool_kernel(TM, M, 1.0 / float(M),
                                    need_row_mask=(Mp != M))

    out = pl.pallas_call(
        kernel,
        out_shape=jax.ShapeDtypeStruct((N, 1, Np), jnp.float32),
        grid=(N, num_m),
        in_specs=[
            pl.BlockSpec((TM, Kp), lambda n, m: (n * num_m + m, 0)),
            pl.BlockSpec((Kp, Np), lambda n, m: (0, 0)),
            pl.BlockSpec((1, Np), lambda n, m: (0, 0)),
        ],
        out_specs=pl.BlockSpec((1, 1, Np), lambda n, m: (n, 0, 0)),
        scratch_shapes=[pltpu.VMEM((1, Np), jnp.float32)],
        compiler_params=pltpu.CompilerParams(
            dimension_semantics=("parallel", "arbitrary")),
    )(patches, wm, bm)

    return out[:, 0, :Cout]                               # [N, Cout]


# ----------------------------- forward ---------------------------------------

def backbone_forward(frames, conv_w, conv_b, train=True):
    """Mirrors backbone_model.forward / model_forward for Recognizer3D."""
    B, S = frames.shape[:2]
    x = frames.reshape(B * S, *frames.shape[2:])          # frames.flatten(0, 1)
    w_f, b_f = fold_preprocess_into_conv(conv_w, conv_b, MEAN, STD)
    pooled = conv3d_relu_meanpool_pallas(x, w_f, b_f)     # backbone + mean([2,3,4])
    out = pooled.reshape(B, S, -1).transpose(0, 2, 1)     # view(B,S,-1).permute(0,2,1)
    return out                                            # [B, Cout, S]


backbone_forward_jit = jax.jit(backbone_forward, static_argnames=("train",))


# ----------------------------- f32 reference ---------------------------------

def reference_forward(frames, conv_w, conv_b):
    B, S, C = frames.shape[:3]
    x = (frames - MEAN.reshape(1, 1, C, 1, 1, 1)) / STD.reshape(1, 1, C, 1, 1, 1)
    x = x.reshape(B * S, *frames.shape[2:])
    xp = jnp.pad(x, ((0, 0), (0, 0), (1, 1), (1, 1), (1, 1)))
    patches, _ = im2col_3d(xp, (3, 3, 3), (1, 2, 2))      # f32
    wm = conv_w.reshape(conv_w.shape[0], -1).T
    y = jnp.maximum(jnp.einsum('nmk,ko->nmo', patches, wm) + conv_b, 0.0)
    pooled = y.mean(axis=1)
    return pooled.reshape(B, S, -1).transpose(0, 2, 1)


# --------------------------------- main ---------------------------------------

if __name__ == "__main__":
    key = jax.random.PRNGKey(0)
    B, S, C, T, H, W = 2, 2, 3, 4, 16, 16
    Cout = 32

    k1, k2, k3 = jax.random.split(key, 3)
    frames = jax.random.uniform(k1, (B, S, C, T, H, W), jnp.float32, 0.0, 255.0)
    # deterministic synthetic Conv3D weights: [Cout, Cin, kT, kH, kW] (PyTorch layout)
    conv_w = jax.random.normal(k2, (Cout, C, 3, 3, 3), jnp.float32) * 0.05
    conv_b = jax.random.normal(k3, (Cout,), jnp.float32) * 0.01

    out = backbone_forward_jit(frames, conv_w, conv_b, train=True)
    out = jax.block_until_ready(out)
    assert out.shape == (B, Cout, S), out.shape
    assert out.dtype == jnp.float32
    assert bool(jnp.all(jnp.isfinite(out)))

    ref = reference_forward(frames, conv_w, conv_b)
    err = float(jnp.max(jnp.abs(out - ref)))
    assert jnp.allclose(out, ref, atol=7e-2, rtol=7e-2), err

    print("KERNEL_OK")
</pallas_src>

<mosaic_0001>
module attributes {stable_mosaic.version = 11 : i64} {
  func.func @kernel(%arg0: i32, %arg1: i32, %arg2: memref<256x128xbf16, #tpu.memory_space<vmem>>, %arg3: memref<128x128xbf16, #tpu.memory_space<vmem>>, %arg4: memref<1x128xf32, #tpu.memory_space<vmem>>, %arg5: memref<1x1x128xf32, #tpu.memory_space<vmem>>, %arg6: memref<1x128xf32, #tpu.memory_space<vmem>>) attributes {dimension_semantics = [#tpu.dimension_semantics<parallel>, #tpu.dimension_semantics<arbitrary>], iteration_bounds = array<i64: 4, 1>, scalar_prefetch = 0 : i64, scratch_operands = 1 : i64, tpu.core_type = #tpu.core_type<tc>, window_params = [{transform_indices = @transform_0, window_bounds = array<i64: 256, 128>}, {pipeline_mode = #tpu.pipeline_mode<synchronous>, transform_indices = @transform_1, window_bounds = array<i64: 128, 128>}, {pipeline_mode = #tpu.pipeline_mode<synchronous>, transform_indices = @transform_2, window_bounds = array<i64: 1, 128>}, {transform_indices = @transform_3, window_bounds = array<i64: 1, 1, 128>}]} {
    %c0_i32 = arith.constant 0 : i32
    %0 = arith.cmpi eq, %arg1, %c0_i32 : i32
    %1 = arith.extui %0 : i1 to i32
    %c0_i32_0 = arith.constant 0 : i32
    %2 = arith.cmpi ne, %1, %c0_i32_0 : i32
    scf.if %2 {
      %cst_14 = arith.constant 0.000000e+00 : f32
      %19 = vector.broadcast %cst_14 : f32 to vector<1x128xf32>
      %c0_15 = arith.constant 0 : index
      %c0_16 = arith.constant 0 : index
      %20 = vector.load %arg6[%c0_15, %c0_16] : memref<1x128xf32, #tpu.memory_space<vmem>>, vector<1x128xf32>
      tpu.vector_store %arg6[%c0_15, %c0_16], %19 {strides = array<i32>} : memref<1x128xf32, #tpu.memory_space<vmem>>, vector<1x128xf32>,
    } else {
    }
    %c0 = arith.constant 0 : index
    %c0_1 = arith.constant 0 : index
    %3 = vector.load %arg2[%c0, %c0_1] : memref<256x128xbf16, #tpu.memory_space<vmem>>, vector<256x128xbf16>
    %c0_2 = arith.constant 0 : index
    %c0_3 = arith.constant 0 : index
    %4 = vector.load %arg3[%c0_2, %c0_3] : memref<128x128xbf16, #tpu.memory_space<vmem>>, vector<128x128xbf16>
    %cst = arith.constant dense<0.000000e+00> : vector<256x128xf32>
    %5 = tpu.matmul %3, %4, %cst {dimension_numbers = #tpu.dot_dimension_numbers<[1], [0], [0], [1], [0, 0, 1, 1], [], []>} : vector<256x128xbf16>, vector<128x128xbf16>, vector<256x128xf32> -> vector<256x128xf32>
    %c0_4 = arith.constant 0 : index
    %c0_5 = arith.constant 0 : index
    %6 = vector.load %arg4[%c0_4, %c0_5] : memref<1x128xf32, #tpu.memory_space<vmem>>, vector<1x128xf32>
    %7 = vector.broadcast %6 : vector<1x128xf32> to vector<256x128xf32>
    %8 = arith.addf %5, %7 : vector<256x128xf32>
    %cst_6 = arith.constant 0.000000e+00 : f32
    %9 = vector.broadcast %cst_6 : f32 to vector<256x128xf32>
    %10 = arith.maximumf %8, %9 : vector<256x128xf32>
    %c0_7 = arith.constant 0 : index
    %c0_8 = arith.constant 0 : index
    %11 = vector.load %arg6[%c0_7, %c0_8] : memref<1x128xf32, #tpu.memory_space<vmem>>, vector<1x128xf32>
    %cst_9 = arith.constant dense<0.000000e+00> : vector<128xf32>
    %12 = vector.multi_reduction <add>, %10, %cst_9 [0] : vector<256x128xf32> to vector<128xf32>
    %13 = vector.shape_cast %12 : vector<128xf32> to vector<1x128xf32>
    %14 = arith.addf %11, %13 : vector<1x128xf32>
    %c0_10 = arith.constant 0 : index
    %c0_11 = arith.constant 0 : index
    %15 = vector.load %arg6[%c0_10, %c0_11] : memref<1x128xf32, #tpu.memory_space<vmem>>, vector<1x128xf32>
    tpu.vector_store %arg6[%c0_10, %c0_11], %14 {strides = array<i32>} : memref<1x128xf32, #tpu.memory_space<vmem>>, vector<1x128xf32>,
    %c0_i32_12 = arith.constant 0 : i32
    %16 = arith.cmpi eq, %arg1, %c0_i32_12 : i32
    %17 = arith.extui %16 : i1 to i32
    %c0_i32_13 = arith.constant 0 : i32
    %18 = arith.cmpi ne, %17, %c0_i32_13 : i32
    scf.if %18 {
      %c0_14 = arith.constant 0 : index
      %c0_15 = arith.constant 0 : index
      %19 = vector.load %arg6[%c0_14, %c0_15] : memref<1x128xf32, #tpu.memory_space<vmem>>, vector<1x128xf32>
      %cst_16 = arith.constant 3.906250e-03 : f32
      %20 = vector.broadcast %cst_16 : f32 to vector<1x128xf32>
      %21 = arith.mulf %19, %20 : vector<1x128xf32>
      %22 = vector.shape_cast %21 : vector<1x128xf32> to vector<1x1x128xf32>
      %c0_17 = arith.constant 0 : index
      %c0_18 = arith.constant 0 : index
      %c0_19 = arith.constant 0 : index
      %23 = vector.load %arg5[%c0_17, %c0_18, %c0_19] : memref<1x1x128xf32, #tpu.memory_space<vmem>>, vector<1x1x128xf32>
      tpu.vector_store %arg5[%c0_17, %c0_18, %c0_19], %22 {strides = array<i32>} : memref<1x1x128xf32, #tpu.memory_space<vmem>>, vector<1x1x128xf32>,
    } else {
    }
    return
  }
  func.func @transform_0(%arg0: i32, %arg1: i32) -> (i32, i32) {
    %c1_i32 = arith.constant 1 : i32
    %0 = arith.muli %arg0, %c1_i32 : i32
    %1 = arith.addi %0, %arg1 : i32
    %c0_i32 = arith.constant 0 : i32
    %c0_i32_0 = arith.constant 0 : i32
    return %1, %c0_i32 : i32, i32
  }
  func.func @transform_1(%arg0: i32, %arg1: i32) -> (i32, i32) {
    %c0_i32 = arith.constant 0 : i32
    %c0_i32_0 = arith.constant 0 : i32
    %c0_i32_1 = arith.constant 0 : i32
    return %c0_i32, %c0_i32_0 : i32, i32
  }
  func.func @transform_2(%arg0: i32, %arg1: i32) -> (i32, i32) {
    %c0_i32 = arith.constant 0 : i32
    %c0_i32_0 = arith.constant 0 : i32
    %c0_i32_1 = arith.constant 0 : i32
    return %c0_i32, %c0_i32_0 : i32, i32
  }
  func.func @transform_3(%arg0: i32, %arg1: i32) -> (i32, i32, i32) {
    %c0_i32 = arith.constant 0 : i32
    %c0_i32_0 = arith.constant 0 : i32
    %c0_i32_1 = arith.constant 0 : i32
    return %arg0, %c0_i32, %c0_i32_0 : i32, i32, i32
  }
}

</mosaic_0001>

<llo_original>
// kernel: backbone_forward.1
$region0: #{backbone_forward.1}
  #allocation0 [shape = 'u32[]', space=smem, size = 0x4, offset = 0x4, fixed_abs, tag = 'smem constant byte address 0x4 - core index']
  #allocation1 [shape = 'u32[144,128]{1,0:T(1,128)}', space=vmem, size = 0x12000, scoped, tag = 'internal scratch']
  #allocation2 [shape = 'f32[1,128]{1,0:T(1,128)}', space=vmem, size = 0x200, scoped, tag = 'scratch operand']
  %s0 = inlined_call_operand.vmem [shape: bf16[1024,128], index: 0, kind: input, shape index: {}]
  %s1 = inlined_call_operand.vmem [shape: bf16[128,128], index: 1, kind: input, shape index: {}]
  %s2 = inlined_call_operand.vmem [shape: f32[1,128], index: 2, kind: input, shape index: {}]
  %s3 = inlined_call_operand.hbm [shape: f32[4,1,128], index: 3, kind: output, shape index: {}]
  %s4 = sld [smem:[#allocation0]]
  $region53: #{backbone_forward.1} parent=0
    _
  %s6 = ssub.s32 1, %s4
  %s7 = scalar_select 0, %s6, %s4
  $region1: #{backbone_forward.1} parent=0
    #allocation3 [shape = 'u8[1024]{0}', space=vmem, size = 0x400, scoped, tag = 'output window, operand 0']
    #allocation4 [shape = 's32[2]{0}', space=sflag, size = 0x8, scoped, tag = 'scoped memory for backbone_forward.1']
    %8 = vsyncpa [#allocation4], 0
    %s9 = scalar_lea.sflag [#allocation4], 1
    %10 = vsyncpa %s9, 0
    loop: start=0, step=1, limit=6
    $region2: #{backbone_forward.1} parent=1 // loop_pre_header
      _
    $region3: #{backbone_forward.1} parent=1 // loop_header
      %s12 = sphi 0, %s16
      %p13 = scmp.ge.s32.totalorder %s12, 6
      %s19 = sphi 0, %s31
      %s20 = sphi 0, %s27
      %s21 = sphi 0, %s19
      %s22 = sphi 0, %s20
      %s23 = sphi 0, %s21
      %s24 = sphi 0, %s22
      %s36 = sphi 0, %s38
      %s39 = sphi 0, %s36
      %s40 = sphi 0, %s39
      %s56 = sphi 0, %s40
      %s60 = sphi 0, %s60
      %s62 = sphi 0, %s60
      %s63 = sphi 0, %s62
      %s77 = sphi 0, %s63
      %s81 = sphi 0, %s81
      %s83 = sphi 0, %s81
      %s84 = sphi 0, %s83
      %s98 = sphi 0, %s84
      %s104 = sphi 0, %s106
      %s107 = sphi 0, %s104
      %s108 = sphi 0, %s107
      %s124 = sphi 0, %s108
    $region4: #{backbone_forward.1} parent=1 // loop_header_branch
      %15 = sbr.rel (%p13) target = $region8
    $region5: #{backbone_forward.1} parent=1 // loop_body
      %s17 = ssub.s32 %s12, 1
      %s18 = ssub.s32 %s12, 2
      %s25 = sadd.s32 1, %s20
      %p26 = scmp.ge.s32.totalorder %s25, 1
      %s27 = scalar_select %p26, 0, %s25
      %s28 = sadd.s32 1, %s19
      %s29 = scalar_select %p26, %s28, %s19
      %p30 = scmp.ge.s32.totalorder %s29, 4
      %s31 = scalar_select %p30, 0, %s29
      %s32 = sadd.s32 %s19, %s20
      %s33 = sadd.s32 %s31, %s27
      %s34 = ssub.s32 %s32, %s33
      %p35 = scmp.eq.s32.totalorder %s34, 0
      %s37 = sadd.s32 %s36, 1
      %s38 = scalar_select %p35, %s36, %s37
      %p41 = pneg %p35
      %p42 = scmp.eq.s32.totalorder %s12, 3
      %p43 = por %p41, %p42
      %p44 = scmp.ne.s32.totalorder %s36, %s39
      %p45 = scmp.eq.s32.totalorder %s12, 0
      %p46 = por %p44, %p45
      %p47 = scmp.ne.s32.totalorder %s36, %s39
      %p48 = scmp.eq.s32.totalorder %s17, 3
      %p49 = por %p47, %p48
      %p50 = scmp.ne.s32.totalorder %s39, %s40
      %p51 = scmp.eq.s32.totalorder %s17, 0
      %p52 = por %p50, %p51
      %p53 = scmp.ne.s32.totalorder %s39, %s40
      %p54 = scmp.eq.s32.totalorder %s18, 3
      %p55 = por %p53, %p54
      %p57 = scmp.ne.s32.totalorder %s40, %s56
      %p58 = scmp.eq.s32.totalorder %s18, 0
      %p59 = por %p57, %p58
      %s61 = sadd.s32 %s60, 1
      %p64 = scmp.eq.s32.totalorder %s12, 3
      %p65 = scmp.ne.s32.totalorder %s60, %s62
      %p66 = scmp.eq.s32.totalorder %s12, 0
      %p67 = por %p65, %p66
      %p68 = scmp.ne.s32.totalorder %s60, %s62
      %p69 = scmp.eq.s32.totalorder %s17, 3
      %p70 = por %p68, %p69
      %p71 = scmp.ne.s32.totalorder %s62, %s63
      %p72 = scmp.eq.s32.totalorder %s17, 0
      %p73 = por %p71, %p72
      %p74 = scmp.ne.s32.totalorder %s62, %s63
      %p75 = scmp.eq.s32.totalorder %s18, 3
      %p76 = por %p74, %p75
      %p78 = scmp.ne.s32.totalorder %s63, %s77
      %p79 = scmp.eq.s32.totalorder %s18, 0
      %p80 = por %p78, %p79
      %s82 = sadd.s32 %s81, 1
      %p85 = scmp.eq.s32.totalorder %s12, 3
      %p86 = scmp.ne.s32.totalorder %s81, %s83
      %p87 = scmp.eq.s32.totalorder %s12, 0
      %p88 = por %p86, %p87
      %p89 = scmp.ne.s32.totalorder %s81, %s83
      %p90 = scmp.eq.s32.totalorder %s17, 3
      %p91 = por %p89, %p90
      %p92 = scmp.ne.s32.totalorder %s83, %s84
      %p93 = scmp.eq.s32.totalorder %s17, 0
      %p94 = por %p92, %p93
      %p95 = scmp.ne.s32.totalorder %s83, %s84
      %p96 = scmp.eq.s32.totalorder %s18, 3
      %p97 = por %p95, %p96
      %p99 = scmp.ne.s32.totalorder %s84, %s98
      %p100 = scmp.eq.s32.totalorder %s18, 0
      %p101 = por %p99, %p100
      %s102 = ssub.s32 %s19, %s31
      %p103 = scmp.eq.s32.totalorder %s102, 0
      %s105 = sadd.s32 %s104, 1
      %s106 = scalar_select %p103, %s104, %s105
      %p109 = pneg %p103
      %p110 = scmp.eq.s32.totalorder %s12, 3
      %p111 = por %p109, %p110
      %p112 = scmp.ne.s32.totalorder %s104, %s107
      %p113 = scmp.eq.s32.totalorder %s12, 0
      %p114 = por %p112, %p113
      %p115 = scmp.ne.s32.totalorder %s104, %s107
      %p116 = scmp.eq.s32.totalorder %s17, 3
      %p117 = por %p115, %p116
      %p118 = scmp.ne.s32.totalorder %s107, %s108
      %p119 = scmp.eq.s32.totalorder %s17, 0
      %p120 = por %p118, %p119
      %p121 = scmp.ne.s32.totalorder %s107, %s108
      %p122 = scmp.eq.s32.totalorder %s18, 3
      %p123 = por %p121, %p122
      %p125 = scmp.ne.s32.totalorder %s108, %s124
      %p126 = scmp.eq.s32.totalorder %s18, 0
      %p127 = por %p125, %p126
      %p128 = scmp.le.s32.totalorder 1, %s12
      %p129 = scmp.lt.s32.totalorder %s12, 5
      %p130 = pnand %p128, %p129
      %p131 = pneg %p130
      // Predicated region
      $region9: #{backbone_forward.1} parent=5 // pred_check
        _
      $region10: #{backbone_forward.1} parent=5 // pred_check_branch
        %133 = sbr.rel (%p130) target = $region12
      $region11: #{backbone_forward.1} parent=5 // pred_region
        %s134 = ssub.s32 %s12, 1
        // Predicated region
        $region13: #{backbone_forward.1} parent=11 // pred_check
          %p135 = pneg %p73
        $region14: #{backbone_forward.1} parent=11 // pred_check_branch
          %137 = sbr.rel (%p135) target = $region16
        $region15: #{backbone_forward.1} parent=11 // pred_region
          _
        $region16: #{backbone_forward.1} parent=11 // pred_fallthru
          _
        // Predicated region
        $region17: #{backbone_forward.1} parent=11 // pred_check
          %p138 = pneg %p94
        $region18: #{backbone_forward.1} parent=11 // pred_check_branch
          %140 = sbr.rel (%p138) target = $region20
        $region19: #{backbone_forward.1} parent=11 // pred_region
          _
        $region20: #{backbone_forward.1} parent=11 // pred_fallthru
          _
      $region12: #{backbone_forward.1} parent=5 // pred_fallthru
        _
      %p141 = scmp.lt.s32.totalorder %s12, 4
      // Predicated region
      $region21: #{backbone_forward.1} parent=5 // pred_check
        %p142 = pneg %p141
      $region22: #{backbone_forward.1} parent=5 // pred_check_branch
        %144 = sbr.rel (%p142) target = $region24
      $region23: #{backbone_forward.1} parent=5 // pred_region
        // Predicated region
        $region25: #{backbone_forward.1} parent=23 // pred_check
          %p145 = pneg %p46
        $region26: #{backbone_forward.1} parent=23 // pred_check_branch
          %147 = sbr.rel (%p145) target = $region28
        $region27: #{backbone_forward.1} parent=23 // pred_region
          %s148 = sadd.s32 %s19, %s20
          %s149 = smul.u32 32, %s148
          %p150 = scmp.lt.s32.totalorder %s149, 127
          %s151 = scalar_select %p150, %s149, 127
          %s152 = smul.addr %s151, 4
          %s153 = scalar_lea.vmem %s0, %s152
          %s154 = sadd.s32 %s19, %s20
          %s155 = smul.u32 32, %s154
        $region28: #{backbone_forward.1} parent=23 // pred_fallthru
          _
      $region24: #{backbone_forward.1} parent=5 // pred_fallthru
        _
      %p156 = scmp.le.s32.totalorder 1, %s12
      %p157 = scmp.lt.s32.totalorder %s12, 5
      %p158 = pnand %p156, %p157
      %p159 = pneg %p158
      // Predicated region
      $region29: #{backbone_forward.1} parent=5 // pred_check
        _
      $region30: #{backbone_forward.1} parent=5 // pred_check_branch
        %161 = sbr.rel (%p158) target = $region32
      $region31: #{backbone_forward.1} parent=5 // pred_region
        %s162 = ssub.s32 %s12, 1
        %s163 = sadd.s32 %s21, %s22
        %s164 = smul.u32 32, %s163
        %p165 = scmp.lt.s32.totalorder %s164, 127
        %s166 = scalar_select %p165, %s164, 127
        %s167 = smul.addr %s166, 4
        %s168 = scalar_lea.vmem %s0, %s167
        %p169 = pneg %p52
        %p170 = pneg %p49
        %p171 = pneg %p73
        %p172 = pneg %p70
        %p173 = pneg %p94
        %p174 = pneg %p91
        %p175 = pneg %p120
        %p176 = pneg %p117
        %s177 = sand.u32 %s107, 1
        %s178 = scalar_lea.sflag [#allocation4], %s177
        %s179 = sand.u32 %s107, 1
        %s180 = scalar_lea.vmem [#allocation3], %s179
        %s181 = sadd.s32 %s21, %s22
        %s182 = smul.u32 32, %s181
        %p183 = scmp.lt.s32.totalorder %s182, 127
        %s184 = scalar_select %p183, %s182, 127
        %s185 = smul.addr %s184, 4
        %s186 = scalar_lea.vmem %s0, %s185
        %s187 = sadd.s32 %s21, %s22
        %s188 = smul.u32 32, %s187
        %p190 = scmp.eq.s32.totalorder %s22, 0
        // Predicated region
        $region33: #{backbone_forward.1} parent=31 // pred_check
          %p191 = pneg %p190
        $region34: #{backbone_forward.1} parent=31 // pred_check_branch
          %193 = sbr.rel (%p191) target = $region36
        $region35: #{backbone_forward.1} parent=31 // pred_region
          %194 = vst [vmem:[#allocation2] sm:$0x1] 0.0
        $region36: #{backbone_forward.1} parent=31 // pred_fallthru
          _
        %v195 = vld [vmem:[%s186] sm:$0xf]
        %v196 = vld [vmem:[%s186 + $0x4] sm:$0xf]
        %v197 = vld [vmem:[%s186 + $0x8] sm:$0xf]
        %v198 = vld [vmem:[%s186 + $0xc] sm:$0xf]
        %v199 = vld [vmem:[%s186 + $0x10] sm:$0xf]
        %v200 = vld [vmem:[%s186 + $0x14] sm:$0xf]
        %v201 = vld [vmem:[%s186 + $0x18] sm:$0xf]
        %v202 = vld [vmem:[%s186 + $0x1c] sm:$0xf]
        %v203 = vld [vmem:[%s186 + $0x20] sm:$0xf]
        %v204 = vld [vmem:[%s186 + $0x24] sm:$0xf]
        %v205 = vld [vmem:[%s186 + $0x28] sm:$0xf]
        %v206 = vld [vmem:[%s186 + $0x2c] sm:$0xf]
        %v207 = vld [vmem:[%s186 + $0x30] sm:$0xf]
        %v208 = vld [vmem:[%s186 + $0x34] sm:$0xf]
        %v209 = vld [vmem:[%s186 + $0x38] sm:$0xf]
        %v210 = vld [vmem:[%s186 + $0x3c] sm:$0xf]
        %v211 = vld [vmem:[%s186 + $0x40] sm:$0xf]
        %v212 = vld [vmem:[%s186 + $0x44] sm:$0xf]
        %v213 = vld [vmem:[%s186 + $0x48] sm:$0xf]
        %v214 = vld [vmem:[%s186 + $0x4c] sm:$0xf]
        %v215 = vld [vmem:[%s186 + $0x50] sm:$0xf]
        %v216 = vld [vmem:[%s186 + $0x54] sm:$0xf]
        %v217 = vld [vmem:[%s186 + $0x58] sm:$0xf]
        %v218 = vld [vmem:[%s186 + $0x5c] sm:$0xf]
        %v219 = vld [vmem:[%s186 + $0x60] sm:$0xf]
        %v220 = vld [vmem:[%s186 + $0x64] sm:$0xf]
        %v221 = vld [vmem:[%s186 + $0x68] sm:$0xf]
        %v222 = vld [vmem:[%s186 + $0x6c] sm:$0xf]
        %v223 = vld [vmem:[%s186 + $0x70] sm:$0xf]
        %v224 = vld [vmem:[%s186 + $0x74] sm:$0xf]
        %v225 = vld [vmem:[%s186 + $0x78] sm:$0xf]
        %v226 = vld [vmem:[%s186 + $0x7c] sm:$0xf]
        %v227 = vld [vmem:[%s1] sm:$0xf]
        %v228 = vld [vmem:[%s1 + $0x4] sm:$0xf]
        %v229 = vld [vmem:[%s1 + $0x8] sm:$0xf]
        %v230 = vld [vmem:[%s1 + $0xc] sm:$0xf]
        %v231 = vld [vmem:[%s1 + $0x10] sm:$0xf]
        %v232 = vld [vmem:[%s1 + $0x14] sm:$0xf]
        %v233 = vld [vmem:[%s1 + $0x18] sm:$0xf]
        %v234 = vld [vmem:[%s1 + $0x1c] sm:$0xf]
        %v235 = vld [vmem:[%s1 + $0x20] sm:$0xf]
        %v236 = vld [vmem:[%s1 + $0x24] sm:$0xf]
        %v237 = vld [vmem:[%s1 + $0x28] sm:$0xf]
        %v238 = vld [vmem:[%s1 + $0x2c] sm:$0xf]
        %v239 = vld [vmem:[%s1 + $0x30] sm:$0xf]
        %v240 = vld [vmem:[%s1 + $0x34] sm:$0xf]
        %v241 = vld [vmem:[%s1 + $0x38] sm:$0xf]
        %v242 = vld [vmem:[%s1 + $0x3c] sm:$0xf]
        %v243 = vld [vmem:[%s2] sm:$0x1]
        %v245 = vlaneseq
        %v246 = vshrl.u32 %v245, 7
        %v247 = vsub.s32 0, %v246
        %v248 = vrot.slane %v243, %v247
        %v282 = vunpack.c.l.b16 %v195
        %v283 = vunpack.c.l.b16 %v196
        %v284 = vunpack.c.l.b16 %v197
        %v285 = vunpack.c.l.b16 %v198
        %v286 = vunpack.c.l.b16 %v199
        %v287 = vunpack.c.l.b16 %v200
        %v288 = vunpack.c.l.b16 %v201
        %v289 = vunpack.c.l.b16 %v202
        %v290 = vunpack.c.l.b16 %v203
        %v291 = vunpack.c.l.b16 %v204
        %v292 = vunpack.c.l.b16 %v205
        %v293 = vunpack.c.l.b16 %v206
        %v294 = vunpack.c.l.b16 %v207
        %v295 = vunpack.c.l.b16 %v208
        %v296 = vunpack.c.l.b16 %v209
        %v297 = vunpack.c.l.b16 %v210
        %v298 = vunpack.c.l.b16 %v211
        %v299 = vunpack.c.l.b16 %v212
        %v300 = vunpack.c.l.b16 %v213
        %v301 = vunpack.c.l.b16 %v214
        %v302 = vunpack.c.l.b16 %v215
        %v303 = vunpack.c.l.b16 %v216
        %v304 = vunpack.c.l.b16 %v217
        %v305 = vunpack.c.l.b16 %v218
        %v306 = vunpack.c.l.b16 %v219
        %v307 = vunpack.c.l.b16 %v220
        %v308 = vunpack.c.l.b16 %v221
        %v309 = vunpack.c.l.b16 %v222
        %v310 = vunpack.c.l.b16 %v223
        %v311 = vunpack.c.l.b16 %v224
        %v312 = vunpack.c.l.b16 %v225
        %v313 = vunpack.c.l.b16 %v226
        %v314 = vpack.c.b16 %v283, %v282
        %v315 = vpack.c.b16 %v285, %v284
        %v316 = vpack.c.b16 %v287, %v286
        %v317 = vpack.c.b16 %v289, %v288
        %v318 = vpack.c.b16 %v291, %v290
        %v319 = vpack.c.b16 %v293, %v292
        %v320 = vpack.c.b16 %v295, %v294
        %v321 = vpack.c.b16 %v297, %v296
        %v322 = vpack.c.b16 %v299, %v298
        %v323 = vpack.c.b16 %v301, %v300
        %v324 = vpack.c.b16 %v303, %v302
        %v325 = vpack.c.b16 %v305, %v304
        %v326 = vpack.c.b16 %v307, %v306
        %v327 = vpack.c.b16 %v309, %v308
        %v328 = vpack.c.b16 %v311, %v310
        %v329 = vpack.c.b16 %v313, %v312
        %v362 = vunpack.c.l.b16 %v227
        %v363 = vunpack.c.l.b16 %v228
        %v364 = vunpack.c.l.b16 %v229
        %v365 = vunpack.c.l.b16 %v230
        %v366 = vunpack.c.l.b16 %v231
        %v367 = vunpack.c.l.b16 %v232
        %v368 = vunpack.c.l.b16 %v233
        %v369 = vunpack.c.l.b16 %v234
        %v370 = vunpack.c.l.b16 %v235
        %v371 = vunpack.c.l.b16 %v236
        %v372 = vunpack.c.l.b16 %v237
        %v373 = vunpack.c.l.b16 %v238
        %v374 = vunpack.c.l.b16 %v239
        %v375 = vunpack.c.l.b16 %v240
        %v376 = vunpack.c.l.b16 %v241
        %v377 = vunpack.c.l.b16 %v242
        %v378 = vpack.c.b16 %v363, %v362
        %v379 = vpack.c.b16 %v365, %v364
        %v380 = vpack.c.b16 %v367, %v366
        %v381 = vpack.c.b16 %v369, %v368
        %v382 = vpack.c.b16 %v371, %v370
        %v383 = vpack.c.b16 %v373, %v372
        %v384 = vpack.c.b16 %v375, %v374
        %v385 = vpack.c.b16 %v377, %v376
        %394 = vmatprep.subr.bf16.mxu0 0
        %395 = vmatpush1.bf16.msra.mxu0 %v378
        %396 = vmatprep.subr.bf16.mxu0 0
        %397 = vmatpush1.bf16.msra.mxu0 %v379
        %398 = vmatprep.subr.bf16.mxu0 0
        %399 = vmatpush1.bf16.msra.mxu0 %v380
        %400 = vmatprep.subr.bf16.mxu0 0
        %401 = vmatpush1.bf16.msra.mxu0 %v381
        %402 = vmatprep.subr.bf16.mxu0 0
        %403 = vmatpush1.bf16.msra.mxu0 %v382
        %404 = vmatprep.subr.bf16.mxu0 0
        %405 = vmatpush1.bf16.msra.mxu0 %v383
        %406 = vmatprep.subr.bf16.mxu0 0
        %407 = vmatpush1.bf16.msra.mxu0 %v384
        %408 = vmatprep.subr.bf16.mxu0 0
        %409 = vmatpush1.bf16.msra.mxu0 %v385
        %410 = vmatprep.subr.bf16.mxu0 0
        %411 = vmatpush1.bf16.msra.mxu0 0
        %412 = vmatprep.subr.bf16.mxu0 0
        %413 = vmatpush1.bf16.msra.mxu0 0
        %414 = vmatprep.subr.bf16.mxu0 0
        %415 = vmatpush1.bf16.msra.mxu0 0
        %416 = vmatprep.subr.bf16.mxu0 0
        %417 = vmatpush1.bf16.msra.mxu0 0
        %418 = vmatprep.subr.bf16.mxu0 0
        %419 = vmatpush1.bf16.msra.mxu0 0
        %420 = vmatprep.subr.bf16.mxu0 0
        %421 = vmatpush1.bf16.msra.mxu0 0
        %422 = vmatprep.subr.bf16.mxu0 0
        %423 = vmatpush1.bf16.msra.mxu0 0
        %424 = vmatprep.subr.bf16.mxu0 0
        %425 = vmatpush1.bf16.msra.mxu0 0
        %426 = vmatprep.mubr.bf16.mxu0 0
        %427 = vmatmul.mubr.bf16.gmra.mrb[0].mxu0 %v314
        %v428 = vpop.f32.mrb[0].mxu0
        %v429 = vadd.f32 %v248, %v428
        %v430 = vpop.f32.mrb[0].mxu0
        %v431 = vpop.f32.mrb[0].mxu0
        %v432 = vadd.f32 %v248, %v431
        %v433 = vpop.f32.mrb[0].mxu0
        %434 = vmatprep.mubr.bf16.mxu0 0
        %435 = vmatmul.mubr.bf16.gmra.mrb[0].mxu0 %v315
        %v436 = vpop.f32.mrb[0].mxu0
        %v437 = vadd.f32 %v248, %v436
        %v438 = vpop.f32.mrb[0].mxu0
        %v439 = vpop.f32.mrb[0].mxu0
        %v440 = vadd.f32 %v248, %v439
        %v441 = vpop.f32.mrb[0].mxu0
        %442 = vmatprep.mubr.bf16.mxu0 0
        %443 = vmatmul.mubr.bf16.gmra.mrb[0].mxu0 %v316
        %v444 = vpop.f32.mrb[0].mxu0
        %v445 = vadd.f32 %v248, %v444
        %v446 = vpop.f32.mrb[0].mxu0
        %v447 = vpop.f32.mrb[0].mxu0
        %v448 = vadd.f32 %v248, %v447
        %v449 = vpop.f32.mrb[0].mxu0
        %450 = vmatprep.mubr.bf16.mxu0 0
        %451 = vmatmul.mubr.bf16.gmra.mrb[0].mxu0 %v317
        %v452 = vpop.f32.mrb[0].mxu0
        %v453 = vadd.f32 %v248, %v452
        %v454 = vpop.f32.mrb[0].mxu0
        %v455 = vpop.f32.mrb[0].mxu0
        %v456 = vadd.f32 %v248, %v455
        %v457 = vpop.f32.mrb[0].mxu0
        %458 = vmatprep.mubr.bf16.mxu0 0
        %459 = vmatmul.mubr.bf16.gmra.mrb[0].mxu0 %v318
        %v460 = vpop.f32.mrb[0].mxu0
        %v461 = vadd.f32 %v248, %v460
        %v462 = vpop.f32.mrb[0].mxu0
        %v463 = vpop.f32.mrb[0].mxu0
        %v464 = vadd.f32 %v248, %v463
        %v465 = vpop.f32.mrb[0].mxu0
        %466 = vmatprep.mubr.bf16.mxu0 0
        %467 = vmatmul.mubr.bf16.gmra.mrb[0].mxu0 %v319
        %v468 = vpop.f32.mrb[0].mxu0
        %v469 = vadd.f32 %v248, %v468
        %v470 = vpop.f32.mrb[0].mxu0
        %v471 = vpop.f32.mrb[0].mxu0
        %v472 = vadd.f32 %v248, %v471
        %v473 = vpop.f32.mrb[0].mxu0
        %474 = vmatprep.mubr.bf16.mxu0 0
        %475 = vmatmul.mubr.bf16.gmra.mrb[0].mxu0 %v320
        %v476 = vpop.f32.mrb[0].mxu0
        %v477 = vadd.f32 %v248, %v476
        %v478 = vpop.f32.mrb[0].mxu0
        %v479 = vpop.f32.mrb[0].mxu0
        %v480 = vadd.f32 %v248, %v479
        %v481 = vpop.f32.mrb[0].mxu0
        %482 = vmatprep.mubr.bf16.mxu0 0
        %483 = vmatmul.mubr.bf16.gmra.mrb[0].mxu0 %v321
        %v484 = vpop.f32.mrb[0].mxu0
        %v485 = vadd.f32 %v248, %v484
        %v486 = vpop.f32.mrb[0].mxu0
        %v487 = vpop.f32.mrb[0].mxu0
        %v488 = vadd.f32 %v248, %v487
        %v489 = vpop.f32.mrb[0].mxu0
        %490 = vmatprep.mubr.bf16.mxu0 0
        %491 = vmatmul.mubr.bf16.gmra.mrb[0].mxu0 %v322
        %v492 = vpop.f32.mrb[0].mxu0
        %v493 = vadd.f32 %v248, %v492
        %v494 = vpop.f32.mrb[0].mxu0
        %v495 = vpop.f32.mrb[0].mxu0
        %v496 = vadd.f32 %v248, %v495
        %v497 = vpop.f32.mrb[0].mxu0
        %498 = vmatprep.mubr.bf16.mxu0 0
        %499 = vmatmul.mubr.bf16.gmra.mrb[0].mxu0 %v323
        %v500 = vpop.f32.mrb[0].mxu0
        %v501 = vadd.f32 %v248, %v500
        %v502 = vpop.f32.mrb[0].mxu0
        %v503 = vpop.f32.mrb[0].mxu0
        %v504 = vadd.f32 %v248, %v503
        %v505 = vpop.f32.mrb[0].mxu0
        %506 = vmatprep.mubr.bf16.mxu0 0
        %507 = vmatmul.mubr.bf16.gmra.mrb[0].mxu0 %v324
        %v508 = vpop.f32.mrb[0].mxu0
        %v509 = vadd.f32 %v248, %v508
        %v510 = vpop.f32.mrb[0].mxu0
        %v511 = vpop.f32.mrb[0].mxu0
        %v512 = vadd.f32 %v248, %v511
        %v513 = vpop.f32.mrb[0].mxu0
        %514 = vmatprep.mubr.bf16.mxu0 0
        %515 = vmatmul.mubr.bf16.gmra.mrb[0].mxu0 %v325
        %v516 = vpop.f32.mrb[0].mxu0
        %v517 = vadd.f32 %v248, %v516
        %v518 = vpop.f32.mrb[0].mxu0
        %v519 = vpop.f32.mrb[0].mxu0
        %v520 = vadd.f32 %v248, %v519
        %v521 = vpop.f32.mrb[0].mxu0
        %522 = vmatprep.mubr.bf16.mxu0 0
        %523 = vmatmul.mubr.bf16.gmra.mrb[0].mxu0 %v326
        %v524 = vpop.f32.mrb[0].mxu0
        %v525 = vadd.f32 %v248, %v524
        %v526 = vpop.f32.mrb[0].mxu0
        %v527 = vpop.f32.mrb[0].mxu0
        %v528 = vadd.f32 %v248, %v527
        %v529 = vpop.f32.mrb[0].mxu0
        %530 = vmatprep.mubr.bf16.mxu0 0
        %531 = vmatmul.mubr.bf16.gmra.mrb[0].mxu0 %v327
        %v532 = vpop.f32.mrb[0].mxu0
        %v533 = vadd.f32 %v248, %v532
        %v534 = vpop.f32.mrb[0].mxu0
        %v535 = vpop.f32.mrb[0].mxu0
        %v536 = vadd.f32 %v248, %v535
        %v537 = vpop.f32.mrb[0].mxu0
        %538 = vmatprep.mubr.bf16.mxu0 0
        %539 = vmatmul.mubr.bf16.gmra.mrb[0].mxu0 %v328
        %v540 = vpop.f32.mrb[0].mxu0
        %v541 = vadd.f32 %v248, %v540
        %v542 = vpop.f32.mrb[0].mxu0
        %v543 = vpop.f32.mrb[0].mxu0
        %v544 = vadd.f32 %v248, %v543
        %v545 = vpop.f32.mrb[0].mxu0
        %546 = vmatprep.mubr.bf16.mxu0 0
        %547 = vmatmul.mubr.bf16.gmra.mrb[0].mxu0 %v329
        %v548 = vpop.f32.mrb[0].mxu0
        %v549 = vadd.f32 %v248, %v548
        %v550 = vpop.f32.mrb[0].mxu0
        %v551 = vpop.f32.mrb[0].mxu0
        %v552 = vadd.f32 %v248, %v551
        %v553 = vpop.f32.mrb[0].mxu0
        %554 = vdwg.mxu0
        %v555 = vmax.f32 %v429, 0.0
        %v556 = vmax.f32 %v432, 0.0
        %v557 = vmax.f32 %v437, 0.0
        %v558 = vmax.f32 %v440, 0.0
        %v559 = vmax.f32 %v445, 0.0
        %v560 = vmax.f32 %v448, 0.0
        %v561 = vmax.f32 %v453, 0.0
        %v562 = vmax.f32 %v456, 0.0
        %v563 = vmax.f32 %v461, 0.0
        %v564 = vmax.f32 %v464, 0.0
        %v565 = vmax.f32 %v469, 0.0
        %v566 = vmax.f32 %v472, 0.0
        %v567 = vmax.f32 %v477, 0.0
        %v568 = vmax.f32 %v480, 0.0
        %v569 = vmax.f32 %v485, 0.0
        %v570 = vmax.f32 %v488, 0.0
        %v571 = vmax.f32 %v493, 0.0
        %v572 = vmax.f32 %v496, 0.0
        %v573 = vmax.f32 %v501, 0.0
        %v574 = vmax.f32 %v504, 0.0
        %v575 = vmax.f32 %v509, 0.0
        %v576 = vmax.f32 %v512, 0.0
        %v577 = vmax.f32 %v517, 0.0
        %v578 = vmax.f32 %v520, 0.0
        %v579 = vmax.f32 %v525, 0.0
        %v580 = vmax.f32 %v528, 0.0
        %v581 = vmax.f32 %v533, 0.0
        %v582 = vmax.f32 %v536, 0.0
        %v583 = vmax.f32 %v541, 0.0
        %v584 = vmax.f32 %v544, 0.0
        %v585 = vmax.f32 %v549, 0.0
        %v586 = vmax.f32 %v552, 0.0
        %v587 = vld [vmem:[#allocation2] sm:$0x1]
        %v588 = vadd.f32 %v555, %v556
        %v589 = vadd.f32 %v588, %v557
        %v590 = vadd.f32 %v589, %v558
        %v591 = vadd.f32 %v590, %v559
        %v592 = vadd.f32 %v591, %v560
        %v593 = vadd.f32 %v592, %v561
        %v594 = vadd.f32 %v593, %v562
        %v595 = vadd.f32 %v594, %v563
        %v596 = vadd.f32 %v595, %v564
        %v597 = vadd.f32 %v596, %v565
        %v598 = vadd.f32 %v597, %v566
        %v599 = vadd.f32 %v598, %v567
        %v600 = vadd.f32 %v599, %v568
        %v601 = vadd.f32 %v600, %v569
        %v602 = vadd.f32 %v601, %v570
        %v603 = vadd.f32 %v602, %v571
        %v604 = vadd.f32 %v603, %v572
        %v605 = vadd.f32 %v604, %v573
        %v606 = vadd.f32 %v605, %v574
        %v607 = vadd.f32 %v606, %v575
        %v608 = vadd.f32 %v607, %v576
        %v609 = vadd.f32 %v608, %v577
        %v610 = vadd.f32 %v609, %v578
        %v611 = vadd.f32 %v610, %v579
        %v612 = vadd.f32 %v611, %v580
        %v613 = vadd.f32 %v612, %v581
        %v614 = vadd.f32 %v613, %v582
        %v615 = vadd.f32 %v614, %v583
        %v616 = vadd.f32 %v615, %v584
        %v617 = vadd.f32 %v616, %v585
        %v618 = vadd.f32 %v617, %v586
        %v619 = vrot.slane %v618, 4
        %v620 = vadd.f32 %v618, %v619
        %v621 = vrot.slane %v620, 2
        %v622 = vadd.f32 %v620, %v621
        %v623 = vrot.slane %v622, 1
        %v624 = vadd.f32 %v622, %v623
        %v625 = vadd.f32 %v587, %v624
        %626 = vst [vmem:[#allocation2] sm:$0x1] %v625
        // Predicated region
        $region37: #{backbone_forward.1} parent=31 // pred_check
          %p627 = pneg %p190
        $region38: #{backbone_forward.1} parent=31 // pred_check_branch
          %629 = sbr.rel (%p627) target = $region40
        $region39: #{backbone_forward.1} parent=31 // pred_region
          %v630 = vld [vmem:[#allocation2] sm:$0x1]
          %v631 = vmul.f32 %v630, 0.00390625
          %632 = vst [vmem:[%s180] sm:$0x1] %v631
        $region40: #{backbone_forward.1} parent=31 // pred_fallthru
          _
        %s633 = sand.u32 %s107, 1
        %s634 = scalar_lea.sflag [#allocation4], %s633
        %s635 = sand.u32 %s107, 1
        %s636 = scalar_lea.vmem [#allocation3], %s635
        // Predicated region
        $region41: #{backbone_forward.1} parent=31 // pred_check
          %p637 = pneg %p117
        $region42: #{backbone_forward.1} parent=31 // pred_check_branch
          %639 = sbr.rel (%p637) target = $region44
        $region43: #{backbone_forward.1} parent=31 // pred_region
          %s641 = ssub.s32 16, 16
          %642 = vsyncadd %s634, %s641
          %s643 = smul.addr %s21, 16
          %s644 = scalar_lea.hbm %s3, %s643
          %s646 = sshll.u32 %s636, 4
          %s647 = int_to_ptr.vmem [resolvable:$true] %s646
          %649 = dma.vmem_to_hbm [thread:$0]  %s647, 16, %s644, %s634
        $region44: #{backbone_forward.1} parent=31 // pred_fallthru
          _
      $region32: #{backbone_forward.1} parent=5 // pred_fallthru
        _
      %p650 = scmp.le.s32.totalorder 2, %s12
      // Predicated region
      $region45: #{backbone_forward.1} parent=5 // pred_check
        %p651 = pneg %p650
      $region46: #{backbone_forward.1} parent=5 // pred_check_branch
        %653 = sbr.rel (%p651) target = $region48
      $region47: #{backbone_forward.1} parent=5 // pred_region
        %s654 = ssub.s32 %s12, 2
        // Predicated region
        $region49: #{backbone_forward.1} parent=47 // pred_check
          %p655 = pneg %p123
        $region50: #{backbone_forward.1} parent=47 // pred_check_branch
          %657 = sbr.rel (%p655) target = $region52
        $region51: #{backbone_forward.1} parent=47 // pred_region
          %s658 = sand.u32 %s108, 1
          %s659 = scalar_lea.sflag [#allocation4], %s658
          %s660 = sand.u32 %s108, 1
          %s661 = scalar_lea.vmem [#allocation3], %s660
          %662 = dma.done %s659, 16
        $region52: #{backbone_forward.1} parent=47 // pred_fallthru
          _
      $region48: #{backbone_forward.1} parent=5 // pred_fallthru
        _
    $region6: #{backbone_forward.1} parent=1 // loop_footer
      %s16 = sadd.s32 1, %s12
    $region7: #{backbone_forward.1} parent=1 // loop_footer_branch
      %11 = sbr.rel target = $region3
    $region8: #{backbone_forward.1} parent=1 // loop_exit
      _
    %663 = vsyncpa [#allocation4], 1
    %s664 = scalar_lea.sflag [#allocation4], 1
    %665 = vsyncpa %s664, 1

</llo_original>
